<compile_context>
chip_gen: v5e
topology: v5e:2x2
jax: 0.10.0
libtpu: 0.0.40
codegen_flags: <defaults>
</compile_context>

<pallas_src>
import functools

import jax
import jax.numpy as jnp
import numpy as np
from jax.experimental import pallas as pl
from jax.experimental.pallas import tpu as pltpu


def make_divisible(v, divisor=8, min_value=None):
    min_value = min_value or divisor
    new_v = max(min_value, int(v + divisor / 2) // divisor * divisor)
    if new_v < 0.9 * v:
        new_v += divisor
    return new_v


def _pick_block_batch(B, H, target_rows=128):
    """Images per grid step.

    Aim for a pointwise-matmul M (= TB*H rows) of >= target_rows so the MXU is
    not pure fill/drain, while keeping >= 2 grid steps when possible so the
    "parallel" grid axis can still be split across v7x's two TensorCores.
    """
    divisors = [d for d in range(1, B + 1) if B % d == 0]
    cands = [d for d in divisors if B // d >= 2] or divisors
    hit = [d for d in cands if d * H >= target_rows]
    return min(hit) if hit else max(cands)


def _dsc_kernel(x_ref,            # (M, Wc)   flat slab of TB images, M = TB*H
                tmask_ref,        # (M, 1)    0 on the first row of each image
                bmask_ref,        # (M, 1)    0 on the last  row of each image
                pool_ref,         # (M, M)    block-diag per-image row-averaging
                w_dw_ref,         # (3, 3, Wc) depthwise weights * BN1 scale, border-masked
                b1_ref,           # (1, Wc)   folded dw bias + BN1 offset
                w_r_ref,          # (Wc, RD)  SE reduce weight (tiled / W)
                b_r_ref,          # (1, RD)
                w_e_ref,          # (RD, Wc)  SE expand weight (tiled)
                b_e_ref,          # (1, Wc)
                w_pw_ref,         # (Wc, Wc)  1x1 conv * BN2 scale, block-diagonal
                b2_ref,           # (1, Wc)   folded pw bias + BN2 offset
                out_ref,          # (M, Wc)
                *, C):
    M, Wc = out_ref.shape

    # Loaded once; reused for the center tap AND the residual add.
    xf = x_ref[...]                                          # (M, Wc)

    # ---- depthwise 3x3, stride 1, 'same' (BN1 folded into weights) ----------
    # H-direction halo: sublane rolls (XLU) + per-row masks; no VMEM scratch,
    # no extra vector stores.  The masks also stop cross-image leakage inside
    # a multi-image slab.
    top = pltpu.roll(xf, 1, 0) * tmask_ref[...]              # x[h-1], 0 at h==0
    bot = pltpu.roll(xf, M - 1, 0) * bmask_ref[...]          # x[h+1], 0 at h==H-1
    # W-direction taps via lane rotations by +-C; the rotation wrap and the
    # w=0 / w=W-1 padding zeros are killed by the border-masked flat weights.
    acc = None
    for kh, slab in enumerate((top, xf, bot)):
        left = pltpu.roll(slab, C, 1)                        # value at (w-1, c)
        right = pltpu.roll(slab, Wc - C, 1)                  # value at (w+1, c)
        part = (left * w_dw_ref[kh, 0, :]
                + slab * w_dw_ref[kh, 1, :]
                + right * w_dw_ref[kh, 2, :])
        acc = part if acc is None else acc + part
    y = jnp.maximum(acc + b1_ref[...], 0.0)                  # BN1 + ReLU (folded)

    # ---- Squeeze-and-Excite (batched over the TB images of the slab) --------
    # Per-image mean over rows: one block-diagonal averaging matmul for the
    # whole slab, then a log2(W) lane-roll fold over the W column groups.  The
    # per-channel mean ends up replicated at every (row, w) position, so the
    # SE matmuls run once per slab and the gate multiplies y directly.
    se = jnp.dot(pool_ref[...], y, preferred_element_type=jnp.float32)
    sh = C
    while sh < Wc:
        se = se + pltpu.roll(se, sh, 1)
        sh *= 2
    r = jnp.maximum(jnp.dot(se, w_r_ref[...], preferred_element_type=jnp.float32)
                    + b_r_ref[...], 0.0)                     # (M, RD)
    gate = jax.nn.sigmoid(jnp.dot(r, w_e_ref[...],
                                  preferred_element_type=jnp.float32)
                          + b_e_ref[...])                    # (M, Wc)
    y = y * gate

    # ---- pointwise 1x1 conv (lane-dense block-diagonal MXU matmul, M=TB*H),
    #      BN2 folded, residual add (stride==1, in_chs==out_chs, no pw act) ----
    z = jnp.dot(y, w_pw_ref[...], preferred_element_type=jnp.float32) + b2_ref[...]
    out_ref[...] = z + xf


def prepare_params(params, H, W):
    """Fold BN scales/offsets into the conv weights and flatten everything into
    the lane-dense (w*C + c) layout used by the kernel.  Done once at load."""
    C = params["w_dw"].shape[-1]
    Wc = W * C
    f32 = jnp.float32
    tile_w = lambda v: jnp.tile(v.astype(f32).reshape(1, C), (1, W))  # (1,C)->(1,Wc)

    s1, o1 = params["s1"].astype(f32), params["o1"].astype(f32)       # (1, C)
    s2, o2 = params["s2"].astype(f32), params["o2"].astype(f32)

    # BN1 folded into the depthwise conv:
    #   relu((dw(x) + b_dw)*s1 + o1) == relu(dw_{w*s1}(x) + (b_dw*s1 + o1))
    w_dw = params["w_dw"].astype(f32) * s1[0]                          # (3,3,C)
    b1 = params["b_dw"].astype(f32) * s1 + o1                          # (1, C)

    # Flat depthwise weights; zero the taps that would cross the w=0 / w=W-1
    # 'same'-padding boundary (this also kills the lane-roll wraparound).
    col = jnp.arange(Wc)
    w_dw_f = jnp.tile(w_dw, (1, 1, W))                                 # (3,3,Wc)
    w_dw_f = w_dw_f.at[:, 0, :].multiply((col >= C).astype(f32))
    w_dw_f = w_dw_f.at[:, 2, :].multiply((col < Wc - C).astype(f32))

    # BN2 folded into the pointwise conv:
    #   (y @ w_pw + b_pw)*s2 + o2 == y @ (w_pw*s2) + (b_pw*s2 + o2)
    w_pw = params["w_pw"].astype(f32) * s2                             # (C, C)
    b2 = params["b_pw"].astype(f32) * s2 + o2                          # (1, C)

    return dict(
        w_dw=w_dw_f,
        b1=tile_w(b1),
        # SE reduce sees the per-channel mean replicated W times -> divide by W.
        w_se_r=jnp.tile(params["w_se_r"].astype(f32), (W, 1)) / W,     # (Wc, RD)
        b_se_r=params["b_se_r"].astype(f32),                           # (1, RD)
        w_se_e=jnp.tile(params["w_se_e"].astype(f32), (1, W)),         # (RD, Wc)
        b_se_e=tile_w(params["b_se_e"]),
        # 1x1 conv as a block-diagonal (Wc, Wc) matrix: one lane-dense matmul.
        # TODO(synk): for large W*C (> ~1024) switch to a per-w-group
        #             (TB*H*W, C) x (C, C_out) formulation; the kron weight is
        #             (W*C)^2 * 4 B and burns W-fold redundant MXU FLOPs.
        w_pw=jnp.kron(jnp.eye(W, dtype=f32), w_pw),
        b2=tile_w(b2),
    )


@jax.jit
def depthwise_separable_conv(x_nhwc, prepped):
    """x_nhwc: (B, H, W, C) float32 -> (B, H, W, C) float32 (NHWC end-to-end)."""
    B, H, W, C = x_nhwc.shape
    # SE lane-roll fold assumes power-of-two W (general W would use a (Wc, C)
    # selector matmul for the squeeze instead).
    assert W & (W - 1) == 0, "W must be a power of two for the SE lane fold"
    assert H % 8 == 0, "H must be a multiple of 8 (sublane-aligned image slabs)"
    Wc = W * C
    RD = prepped["w_se_r"].shape[1]

    TB = _pick_block_batch(B, H)          # images per grid step
    M = TB * H                            # rows per step = pointwise-matmul M

    # Free reshape: (B, H, W, C) -> (B*H, W*C); channels fold into the lane dim.
    x_flat = x_nhwc.reshape(B * H, Wc)

    # Per-row halo masks and the per-image row-averaging matrix for a TB-image
    # slab (shape-static; computed once per compile, fetched once per step).
    rows = jnp.arange(M, dtype=jnp.int32)
    hpos = rows % H
    tmask = (hpos != 0).astype(jnp.float32)[:, None]                   # (M, 1)
    bmask = (hpos != H - 1).astype(jnp.float32)[:, None]               # (M, 1)
    img = rows // H
    pool = (img[:, None] == img[None, :]).astype(jnp.float32) / (H * W)  # (M, M)

    full = lambda shape: pl.BlockSpec(shape, lambda b: (0,) * len(shape))
    # TODO(synk): single-buffer these constant operands (pipeline_mode=
    #             pl.Buffered(1)) once weight footprints grow; negligible here.
    in_specs = [
        pl.BlockSpec((M, Wc), lambda b: (b, 0)),     # x slab (TB images)
        full((M, 1)), full((M, 1)), full((M, M)),    # tmask, bmask, pool
        full((3, 3, Wc)), full((1, Wc)),             # dw weights / bias (BN1 folded)
        full((Wc, RD)), full((1, RD)),               # SE reduce
        full((RD, Wc)), full((1, Wc)),               # SE expand
        full((Wc, Wc)), full((1, Wc)),               # pw weights / bias (BN2 folded)
    ]

    y = pl.pallas_call(
        functools.partial(_dsc_kernel, C=C),
        out_shape=jax.ShapeDtypeStruct((B * H, Wc), jnp.float32),
        grid=(B // TB,),
        in_specs=in_specs,
        out_specs=pl.BlockSpec((M, Wc), lambda b: (b, 0)),
        compiler_params=pltpu.CompilerParams(
            dimension_semantics=("parallel",),
            vmem_limit_bytes=32 * 1024 * 1024),
    )(x_flat, tmask, bmask, pool,
      prepped["w_dw"], prepped["b1"],
      prepped["w_se_r"], prepped["b_se_r"],
      prepped["w_se_e"], prepped["b_se_e"],
      prepped["w_pw"], prepped["b2"])

    return y.reshape(B, H, W, C)          # free reshape back


def depthwise_separable_conv_nchw(x_nchw, prepped):
    # Compatibility path for PyTorch-style NCHW tensors.  Preferred integration
    # keeps the surrounding model NHWC so these HBM round trips disappear.
    x = jnp.transpose(x_nchw, (0, 2, 3, 1))
    return jnp.transpose(depthwise_separable_conv(x, prepped), (0, 3, 1, 2))


def _reference_nhwc(x, params):
    """Pure-JAX NHWC reference replicating the PyTorch forward (eval-mode BN)."""
    B, H, W, C = x.shape
    xp = jnp.pad(x, ((0, 0), (1, 1), (1, 1), (0, 0)))
    acc = jnp.zeros_like(x)
    for kh in range(3):
        for kw in range(3):
            acc = acc + xp[:, kh:kh + H, kw:kw + W, :] * params["w_dw"][kh, kw]
    y = acc + params["b_dw"][0]
    y = jnp.maximum(y * params["s1"][0] + params["o1"][0], 0.0)
    se = jnp.mean(y, axis=(1, 2))                                    # (B, C)
    r = jnp.maximum(se @ params["w_se_r"] + params["b_se_r"], 0.0)
    gate = jax.nn.sigmoid(r @ params["w_se_e"] + params["b_se_e"])   # (B, C)
    y = y * gate[:, None, None, :]
    z = jnp.einsum("bhwc,co->bhwo", y, params["w_pw"]) + params["b_pw"][0]
    z = z * params["s2"][0] + params["o2"][0]
    return z + x


def _init_params(key, C, se_ratio=0.25):
    RD = make_divisible(C * se_ratio, divisor=1)
    ks = jax.random.split(key, 12)
    eps = 1e-5

    def fold_bn(kg, kb, km, kv, n):
        gamma = 1.0 + 0.1 * jax.random.normal(kg, (n,), jnp.float32)
        beta = 0.1 * jax.random.normal(kb, (n,), jnp.float32)
        mean = 0.1 * jax.random.normal(km, (n,), jnp.float32)
        var = 0.5 + jnp.abs(jax.random.normal(kv, (n,), jnp.float32))
        scale = gamma / jnp.sqrt(var + eps)
        offset = beta - mean * scale
        return scale.reshape(1, n), offset.reshape(1, n)

    s1, o1 = fold_bn(ks[0], ks[1], ks[2], ks[3], C)
    s2, o2 = fold_bn(ks[4], ks[5], ks[6], ks[7], C)
    return dict(
        w_dw=0.2 * jax.random.normal(ks[8], (3, 3, C), jnp.float32),
        b_dw=0.05 * jax.random.normal(ks[9], (1, C), jnp.float32),
        s1=s1, o1=o1, s2=s2, o2=o2,
        w_se_r=0.3 * jax.random.normal(ks[10], (C, RD), jnp.float32),
        b_se_r=jnp.zeros((1, RD), jnp.float32),
        w_se_e=0.3 * jax.random.normal(ks[11], (RD, C), jnp.float32),
        b_se_e=jnp.zeros((1, C), jnp.float32),
        w_pw=0.2 * jax.random.normal(jax.random.fold_in(key, 100), (C, C), jnp.float32),
        b_pw=0.05 * jax.random.normal(jax.random.fold_in(key, 101), (1, C), jnp.float32),
    )


if __name__ == "__main__":
    key = jax.random.PRNGKey(0)
    # Two configs: (B=2 -> TB=1, 2 grid steps) and (B=8 -> TB=4, multi-image
    # slabs with M=64 pointwise-matmul rows).  W*C = 128 -> one full lane tile.
    configs = [(2, 16, 16, 8), (8, 16, 16, 8)]
    for i, (B, H, W, C) in enumerate(configs):
        x = jax.random.normal(jax.random.fold_in(key, i + 1), (B, H, W, C),
                              jnp.float32)
        params = _init_params(jax.random.fold_in(key, 100 + i), C, se_ratio=0.25)
        prepped = prepare_params(params, H, W)

        out = jax.block_until_ready(depthwise_separable_conv(x, prepped))
        ref = jax.block_until_ready(_reference_nhwc(x, params))
        np.testing.assert_allclose(np.asarray(out), np.asarray(ref),
                                   rtol=1e-4, atol=1e-4)
    print("KERNEL_OK")
</pallas_src>

<mosaic_0001>
module attributes {stable_mosaic.version = 11 : i64} {
  func.func @_dsc_kernel(%arg0: i32, %arg1: memref<16x128xf32, #tpu.memory_space<vmem>>, %arg2: memref<16x1xf32, #tpu.memory_space<vmem>>, %arg3: memref<16x1xf32, #tpu.memory_space<vmem>>, %arg4: memref<16x16xf32, #tpu.memory_space<vmem>>, %arg5: memref<3x3x128xf32, #tpu.memory_space<vmem>>, %arg6: memref<1x128xf32, #tpu.memory_space<vmem>>, %arg7: memref<128x2xf32, #tpu.memory_space<vmem>>, %arg8: memref<1x2xf32, #tpu.memory_space<vmem>>, %arg9: memref<2x128xf32, #tpu.memory_space<vmem>>, %arg10: memref<1x128xf32, #tpu.memory_space<vmem>>, %arg11: memref<128x128xf32, #tpu.memory_space<vmem>>, %arg12: memref<1x128xf32, #tpu.memory_space<vmem>>, %arg13: memref<16x128xf32, #tpu.memory_space<vmem>>) attributes {dimension_semantics = [#tpu.dimension_semantics<parallel>], iteration_bounds = array<i64: 2>, scalar_prefetch = 0 : i64, scratch_operands = 0 : i64, tpu.core_type = #tpu.core_type<tc>, window_params = [{transform_indices = @transform_0, window_bounds = array<i64: 16, 128>}, {pipeline_mode = #tpu.pipeline_mode<synchronous>, transform_indices = @transform_1, window_bounds = array<i64: 16, 1>}, {pipeline_mode = #tpu.pipeline_mode<synchronous>, transform_indices = @transform_2, window_bounds = array<i64: 16, 1>}, {pipeline_mode = #tpu.pipeline_mode<synchronous>, transform_indices = @transform_3, window_bounds = array<i64: 16, 16>}, {pipeline_mode = #tpu.pipeline_mode<synchronous>, transform_indices = @transform_4, window_bounds = array<i64: 3, 3, 128>}, {pipeline_mode = #tpu.pipeline_mode<synchronous>, transform_indices = @transform_5, window_bounds = array<i64: 1, 128>}, {pipeline_mode = #tpu.pipeline_mode<synchronous>, transform_indices = @transform_6, window_bounds = array<i64: 128, 2>}, {pipeline_mode = #tpu.pipeline_mode<synchronous>, transform_indices = @transform_7, window_bounds = array<i64: 1, 2>}, {pipeline_mode = #tpu.pipeline_mode<synchronous>, transform_indices = @transform_8, window_bounds = array<i64: 2, 128>}, {pipeline_mode = #tpu.pipeline_mode<synchronous>, transform_indices = @transform_9, window_bounds = array<i64: 1, 128>}, {pipeline_mode = #tpu.pipeline_mode<synchronous>, transform_indices = @transform_10, window_bounds = array<i64: 128, 128>}, {pipeline_mode = #tpu.pipeline_mode<synchronous>, transform_indices = @transform_11, window_bounds = array<i64: 1, 128>}, {transform_indices = @transform_12, window_bounds = array<i64: 16, 128>}]} {
    %c0 = arith.constant 0 : index
    %c0_0 = arith.constant 0 : index
    %0 = vector.load %arg1[%c0, %c0_0] : memref<16x128xf32, #tpu.memory_space<vmem>>, vector<16x128xf32>
    %c1_i32 = arith.constant 1 : i32
    %1 = tpu.dynamic_rotate %0 by %c1_i32 dim 0 : vector<16x128xf32>, i32 -> vector<16x128xf32>
    %c0_1 = arith.constant 0 : index
    %c0_2 = arith.constant 0 : index
    %2 = vector.load %arg2[%c0_1, %c0_2] : memref<16x1xf32, #tpu.memory_space<vmem>>, vector<16x1xf32>
    %3 = vector.broadcast %2 : vector<16x1xf32> to vector<16x128xf32>
    %4 = arith.mulf %1, %3 : vector<16x128xf32>
    %c15_i32 = arith.constant 15 : i32
    %5 = tpu.dynamic_rotate %0 by %c15_i32 dim 0 : vector<16x128xf32>, i32 -> vector<16x128xf32>
    %c0_3 = arith.constant 0 : index
    %c0_4 = arith.constant 0 : index
    %6 = vector.load %arg3[%c0_3, %c0_4] : memref<16x1xf32, #tpu.memory_space<vmem>>, vector<16x1xf32>
    %7 = vector.broadcast %6 : vector<16x1xf32> to vector<16x128xf32>
    %8 = arith.mulf %5, %7 : vector<16x128xf32>
    %c8_i32 = arith.constant 8 : i32
    %9 = tpu.dynamic_rotate %4 by %c8_i32 dim 1 : vector<16x128xf32>, i32 -> vector<16x128xf32>
    %c120_i32 = arith.constant 120 : i32
    %10 = tpu.dynamic_rotate %4 by %c120_i32 dim 1 : vector<16x128xf32>, i32 -> vector<16x128xf32>
    %c0_5 = arith.constant 0 : index
    %c0_6 = arith.constant 0 : index
    %c0_7 = arith.constant 0 : index
    %11 = vector.load %arg5[%c0_5, %c0_6, %c0_7] : memref<3x3x128xf32, #tpu.memory_space<vmem>>, vector<1x1x128xf32>
    %12 = vector.shape_cast %11 : vector<1x1x128xf32> to vector<128xf32>
    %13 = vector.shape_cast %12 : vector<128xf32> to vector<1x128xf32>
    %14 = vector.broadcast %13 : vector<1x128xf32> to vector<16x128xf32>
    %15 = arith.mulf %9, %14 : vector<16x128xf32>
    %c0_8 = arith.constant 0 : index
    %c1 = arith.constant 1 : index
    %c0_9 = arith.constant 0 : index
    %16 = vector.load %arg5[%c0_8, %c1, %c0_9] : memref<3x3x128xf32, #tpu.memory_space<vmem>>, vector<1x1x128xf32>
    %17 = vector.shape_cast %16 : vector<1x1x128xf32> to vector<128xf32>
    %18 = vector.shape_cast %17 : vector<128xf32> to vector<1x128xf32>
    %19 = vector.broadcast %18 : vector<1x128xf32> to vector<16x128xf32>
    %20 = arith.mulf %4, %19 : vector<16x128xf32>
    %21 = arith.addf %15, %20 : vector<16x128xf32>
    %c0_10 = arith.constant 0 : index
    %c2 = arith.constant 2 : index
    %c0_11 = arith.constant 0 : index
    %22 = vector.load %arg5[%c0_10, %c2, %c0_11] : memref<3x3x128xf32, #tpu.memory_space<vmem>>, vector<1x1x128xf32>
    %23 = vector.shape_cast %22 : vector<1x1x128xf32> to vector<128xf32>
    %24 = vector.shape_cast %23 : vector<128xf32> to vector<1x128xf32>
    %25 = vector.broadcast %24 : vector<1x128xf32> to vector<16x128xf32>
    %26 = arith.mulf %10, %25 : vector<16x128xf32>
    %27 = arith.addf %21, %26 : vector<16x128xf32>
    %c8_i32_12 = arith.constant 8 : i32
    %28 = tpu.dynamic_rotate %0 by %c8_i32_12 dim 1 : vector<16x128xf32>, i32 -> vector<16x128xf32>
    %c120_i32_13 = arith.constant 120 : i32
    %29 = tpu.dynamic_rotate %0 by %c120_i32_13 dim 1 : vector<16x128xf32>, i32 -> vector<16x128xf32>
    %c1_14 = arith.constant 1 : index
    %c0_15 = arith.constant 0 : index
    %c0_16 = arith.constant 0 : index
    %30 = vector.load %arg5[%c1_14, %c0_15, %c0_16] : memref<3x3x128xf32, #tpu.memory_space<vmem>>, vector<1x1x128xf32>
    %31 = vector.shape_cast %30 : vector<1x1x128xf32> to vector<128xf32>
    %32 = vector.shape_cast %31 : vector<128xf32> to vector<1x128xf32>
    %33 = vector.broadcast %32 : vector<1x128xf32> to vector<16x128xf32>
    %34 = arith.mulf %28, %33 : vector<16x128xf32>
    %c1_17 = arith.constant 1 : index
    %c1_18 = arith.constant 1 : index
    %c0_19 = arith.constant 0 : index
    %35 = vector.load %arg5[%c1_17, %c1_18, %c0_19] : memref<3x3x128xf32, #tpu.memory_space<vmem>>, vector<1x1x128xf32>
    %36 = vector.shape_cast %35 : vector<1x1x128xf32> to vector<128xf32>
    %37 = vector.shape_cast %36 : vector<128xf32> to vector<1x128xf32>
    %38 = vector.broadcast %37 : vector<1x128xf32> to vector<16x128xf32>
    %39 = arith.mulf %0, %38 : vector<16x128xf32>
    %40 = arith.addf %34, %39 : vector<16x128xf32>
    %c1_20 = arith.constant 1 : index
    %c2_21 = arith.constant 2 : index
    %c0_22 = arith.constant 0 : index
    %41 = vector.load %arg5[%c1_20, %c2_21, %c0_22] : memref<3x3x128xf32, #tpu.memory_space<vmem>>, vector<1x1x128xf32>
    %42 = vector.shape_cast %41 : vector<1x1x128xf32> to vector<128xf32>
    %43 = vector.shape_cast %42 : vector<128xf32> to vector<1x128xf32>
    %44 = vector.broadcast %43 : vector<1x128xf32> to vector<16x128xf32>
    %45 = arith.mulf %29, %44 : vector<16x128xf32>
    %46 = arith.addf %40, %45 : vector<16x128xf32>
    %47 = arith.addf %27, %46 : vector<16x128xf32>
    %c8_i32_23 = arith.constant 8 : i32
    %48 = tpu.dynamic_rotate %8 by %c8_i32_23 dim 1 : vector<16x128xf32>, i32 -> vector<16x128xf32>
    %c120_i32_24 = arith.constant 120 : i32
    %49 = tpu.dynamic_rotate %8 by %c120_i32_24 dim 1 : vector<16x128xf32>, i32 -> vector<16x128xf32>
    %c2_25 = arith.constant 2 : index
    %c0_26 = arith.constant 0 : index
    %c0_27 = arith.constant 0 : index
    %50 = vector.load %arg5[%c2_25, %c0_26, %c0_27] : memref<3x3x128xf32, #tpu.memory_space<vmem>>, vector<1x1x128xf32>
    %51 = vector.shape_cast %50 : vector<1x1x128xf32> to vector<128xf32>
    %52 = vector.shape_cast %51 : vector<128xf32> to vector<1x128xf32>
    %53 = vector.broadcast %52 : vector<1x128xf32> to vector<16x128xf32>
    %54 = arith.mulf %48, %53 : vector<16x128xf32>
    %c2_28 = arith.constant 2 : index
    %c1_29 = arith.constant 1 : index
    %c0_30 = arith.constant 0 : index
    %55 = vector.load %arg5[%c2_28, %c1_29, %c0_30] : memref<3x3x128xf32, #tpu.memory_space<vmem>>, vector<1x1x128xf32>
    %56 = vector.shape_cast %55 : vector<1x1x128xf32> to vector<128xf32>
    %57 = vector.shape_cast %56 : vector<128xf32> to vector<1x128xf32>
    %58 = vector.broadcast %57 : vector<1x128xf32> to vector<16x128xf32>
    %59 = arith.mulf %8, %58 : vector<16x128xf32>
    %60 = arith.addf %54, %59 : vector<16x128xf32>
    %c2_31 = arith.constant 2 : index
    %c2_32 = arith.constant 2 : index
    %c0_33 = arith.constant 0 : index
    %61 = vector.load %arg5[%c2_31, %c2_32, %c0_33] : memref<3x3x128xf32, #tpu.memory_space<vmem>>, vector<1x1x128xf32>
    %62 = vector.shape_cast %61 : vector<1x1x128xf32> to vector<128xf32>
    %63 = vector.shape_cast %62 : vector<128xf32> to vector<1x128xf32>
    %64 = vector.broadcast %63 : vector<1x128xf32> to vector<16x128xf32>
    %65 = arith.mulf %49, %64 : vector<16x128xf32>
    %66 = arith.addf %60, %65 : vector<16x128xf32>
    %67 = arith.addf %47, %66 : vector<16x128xf32>
    %c0_34 = arith.constant 0 : index
    %c0_35 = arith.constant 0 : index
    %68 = vector.load %arg6[%c0_34, %c0_35] : memref<1x128xf32, #tpu.memory_space<vmem>>, vector<1x128xf32>
    %69 = vector.broadcast %68 : vector<1x128xf32> to vector<16x128xf32>
    %70 = arith.addf %67, %69 : vector<16x128xf32>
    %cst = arith.constant 0.000000e+00 : f32
    %71 = vector.broadcast %cst : f32 to vector<16x128xf32>
    %72 = arith.maximumf %70, %71 : vector<16x128xf32>
    %c0_36 = arith.constant 0 : index
    %c0_37 = arith.constant 0 : index
    %73 = vector.load %arg4[%c0_36, %c0_37] : memref<16x16xf32, #tpu.memory_space<vmem>>, vector<16x16xf32>
    %cst_38 = arith.constant dense<0.000000e+00> : vector<16x128xf32>
    %74 = tpu.matmul %73, %72, %cst_38 {dimension_numbers = #tpu.dot_dimension_numbers<[1], [0], [0], [1], [0, 0, 1, 1], [], []>} : vector<16x16xf32>, vector<16x128xf32>, vector<16x128xf32> -> vector<16x128xf32>
    %c8_i32_39 = arith.constant 8 : i32
    %75 = tpu.dynamic_rotate %74 by %c8_i32_39 dim 1 : vector<16x128xf32>, i32 -> vector<16x128xf32>
    %76 = arith.addf %74, %75 : vector<16x128xf32>
    %c16_i32 = arith.constant 16 : i32
    %77 = tpu.dynamic_rotate %76 by %c16_i32 dim 1 : vector<16x128xf32>, i32 -> vector<16x128xf32>
    %78 = arith.addf %76, %77 : vector<16x128xf32>
    %c32_i32 = arith.constant 32 : i32
    %79 = tpu.dynamic_rotate %78 by %c32_i32 dim 1 : vector<16x128xf32>, i32 -> vector<16x128xf32>
    %80 = arith.addf %78, %79 : vector<16x128xf32>
    %c64_i32 = arith.constant 64 : i32
    %81 = tpu.dynamic_rotate %80 by %c64_i32 dim 1 : vector<16x128xf32>, i32 -> vector<16x128xf32>
    %82 = arith.addf %80, %81 : vector<16x128xf32>
    %c0_40 = arith.constant 0 : index
    %c0_41 = arith.constant 0 : index
    %83 = vector.load %arg7[%c0_40, %c0_41] : memref<128x2xf32, #tpu.memory_space<vmem>>, vector<128x2xf32>
    %cst_42 = arith.constant dense<0.000000e+00> : vector<16x2xf32>
    %84 = tpu.matmul %82, %83, %cst_42 {dimension_numbers = #tpu.dot_dimension_numbers<[1], [0], [0], [1], [0, 0, 1, 1], [], []>} : vector<16x128xf32>, vector<128x2xf32>, vector<16x2xf32> -> vector<16x2xf32>
    %c0_43 = arith.constant 0 : index
    %c0_44 = arith.constant 0 : index
    %85 = vector.load %arg8[%c0_43, %c0_44] : memref<1x2xf32, #tpu.memory_space<vmem>>, vector<1x2xf32>
    %86 = vector.broadcast %85 : vector<1x2xf32> to vector<16x2xf32>
    %87 = arith.addf %84, %86 : vector<16x2xf32>
    %cst_45 = arith.constant 0.000000e+00 : f32
    %88 = vector.broadcast %cst_45 : f32 to vector<16x2xf32>
    %89 = arith.maximumf %87, %88 : vector<16x2xf32>
    %c0_46 = arith.constant 0 : index
    %c0_47 = arith.constant 0 : index
    %90 = vector.load %arg9[%c0_46, %c0_47] : memref<2x128xf32, #tpu.memory_space<vmem>>, vector<2x128xf32>
    %cst_48 = arith.constant dense<0.000000e+00> : vector<16x128xf32>
    %91 = tpu.matmul %89, %90, %cst_48 {dimension_numbers = #tpu.dot_dimension_numbers<[1], [0], [0], [1], [0, 0, 1, 1], [], []>} : vector<16x2xf32>, vector<2x128xf32>, vector<16x128xf32> -> vector<16x128xf32>
    %c0_49 = arith.constant 0 : index
    %c0_50 = arith.constant 0 : index
    %92 = vector.load %arg10[%c0_49, %c0_50] : memref<1x128xf32, #tpu.memory_space<vmem>>, vector<1x128xf32>
    %93 = vector.broadcast %92 : vector<1x128xf32> to vector<16x128xf32>
    %94 = arith.addf %91, %93 : vector<16x128xf32>
    %95 = arith.negf %94 : vector<16x128xf32>
    %96 = math.exp %95 : vector<16x128xf32>
    %cst_51 = arith.constant 1.000000e+00 : f32
    %97 = vector.broadcast %cst_51 : f32 to vector<16x128xf32>
    %98 = arith.addf %97, %96 : vector<16x128xf32>
    %99 = arith.divf %97, %98 : vector<16x128xf32>
    %100 = arith.mulf %72, %99 : vector<16x128xf32>
    %c0_52 = arith.constant 0 : index
    %c0_53 = arith.constant 0 : index
    %101 = vector.load %arg11[%c0_52, %c0_53] : memref<128x128xf32, #tpu.memory_space<vmem>>, vector<128x128xf32>
    %cst_54 = arith.constant dense<0.000000e+00> : vector<16x128xf32>
    %102 = tpu.matmul %100, %101, %cst_54 {dimension_numbers = #tpu.dot_dimension_numbers<[1], [0], [0], [1], [0, 0, 1, 1], [], []>} : vector<16x128xf32>, vector<128x128xf32>, vector<16x128xf32> -> vector<16x128xf32>
    %c0_55 = arith.constant 0 : index
    %c0_56 = arith.constant 0 : index
    %103 = vector.load %arg12[%c0_55, %c0_56] : memref<1x128xf32, #tpu.memory_space<vmem>>, vector<1x128xf32>
    %104 = vector.broadcast %103 : vector<1x128xf32> to vector<16x128xf32>
    %105 = arith.addf %102, %104 : vector<16x128xf32>
    %106 = arith.addf %105, %0 : vector<16x128xf32>
    %c0_57 = arith.constant 0 : index
    %c0_58 = arith.constant 0 : index
    %107 = vector.load %arg13[%c0_57, %c0_58] : memref<16x128xf32, #tpu.memory_space<vmem>>, vector<16x128xf32>
    tpu.vector_store %arg13[%c0_57, %c0_58], %106 {strides = array<i32>} : memref<16x128xf32, #tpu.memory_space<vmem>>, vector<16x128xf32>,
    return
  }
  func.func @transform_0(%arg0: i32) -> (i32, i32) {
    %c0_i32 = arith.constant 0 : i32
    %c0_i32_0 = arith.constant 0 : i32
    return %arg0, %c0_i32 : i32, i32
  }
  func.func @transform_1(%arg0: i32) -> (i32, i32) {
    %c0_i32 = arith.constant 0 : i32
    %c0_i32_0 = arith.constant 0 : i32
    %c0_i32_1 = arith.constant 0 : i32
    return %c0_i32, %c0_i32_0 : i32, i32
  }
  func.func @transform_2(%arg0: i32) -> (i32, i32) {
    %c0_i32 = arith.constant 0 : i32
    %c0_i32_0 = arith.constant 0 : i32
    %c0_i32_1 = arith.constant 0 : i32
    return %c0_i32, %c0_i32_0 : i32, i32
  }
  func.func @transform_3(%arg0: i32) -> (i32, i32) {
    %c0_i32 = arith.constant 0 : i32
    %c0_i32_0 = arith.constant 0 : i32
    %c0_i32_1 = arith.constant 0 : i32
    return %c0_i32, %c0_i32_0 : i32, i32
  }
  func.func @transform_4(%arg0: i32) -> (i32, i32, i32) {
    %c0_i32 = arith.constant 0 : i32
    %c0_i32_0 = arith.constant 0 : i32
    %c0_i32_1 = arith.constant 0 : i32
    %c0_i32_2 = arith.constant 0 : i32
    return %c0_i32, %c0_i32_0, %c0_i32_1 : i32, i32, i32
  }
  func.func @transform_5(%arg0: i32) -> (i32, i32) {
    %c0_i32 = arith.constant 0 : i32
    %c0_i32_0 = arith.constant 0 : i32
    %c0_i32_1 = arith.constant 0 : i32
    return %c0_i32, %c0_i32_0 : i32, i32
  }
  func.func @transform_6(%arg0: i32) -> (i32, i32) {
    %c0_i32 = arith.constant 0 : i32
    %c0_i32_0 = arith.constant 0 : i32
    %c0_i32_1 = arith.constant 0 : i32
    return %c0_i32, %c0_i32_0 : i32, i32
  }
  func.func @transform_7(%arg0: i32) -> (i32, i32) {
    %c0_i32 = arith.constant 0 : i32
    %c0_i32_0 = arith.constant 0 : i32
    %c0_i32_1 = arith.constant 0 : i32
    return %c0_i32, %c0_i32_0 : i32, i32
  }
  func.func @transform_8(%arg0: i32) -> (i32, i32) {
    %c0_i32 = arith.constant 0 : i32
    %c0_i32_0 = arith.constant 0 : i32
    %c0_i32_1 = arith.constant 0 : i32
    return %c0_i32, %c0_i32_0 : i32, i32
  }
  func.func @transform_9(%arg0: i32) -> (i32, i32) {
    %c0_i32 = arith.constant 0 : i32
    %c0_i32_0 = arith.constant 0 : i32
    %c0_i32_1 = arith.constant 0 : i32
    return %c0_i32, %c0_i32_0 : i32, i32
  }
  func.func @transform_10(%arg0: i32) -> (i32, i32) {
    %c0_i32 = arith.constant 0 : i32
    %c0_i32_0 = arith.constant 0 : i32
    %c0_i32_1 = arith.constant 0 : i32
    return %c0_i32, %c0_i32_0 : i32, i32
  }
  func.func @transform_11(%arg0: i32) -> (i32, i32) {
    %c0_i32 = arith.constant 0 : i32
    %c0_i32_0 = arith.constant 0 : i32
    %c0_i32_1 = arith.constant 0 : i32
    return %c0_i32, %c0_i32_0 : i32, i32
  }
  func.func @transform_12(%arg0: i32) -> (i32, i32) {
    %c0_i32 = arith.constant 0 : i32
    %c0_i32_0 = arith.constant 0 : i32
    return %arg0, %c0_i32 : i32, i32
  }
}

</mosaic_0001>

<llo_original>
// kernel: depthwise_separable_conv.1
$region0: #{depthwise_separable_conv.1}
  #allocation0 [shape = 'u32[]', space=smem, size = 0x4, offset = 0x4, fixed_abs, tag = 'smem constant byte address 0x4 - core index']
  #allocation1 [shape = 'u32[72,128]{1,0:T(1,128)}', space=vmem, size = 0x9000, scoped, tag = 'internal scratch']
  %s0 = inlined_call_operand.vmem [shape: f32[32,128], index: 0, kind: input, shape index: {}]
  %s1 = inlined_call_operand.vmem [shape: f32[16,1], index: 1, kind: input, shape index: {}]
  %s2 = inlined_call_operand.vmem [shape: f32[16,1], index: 2, kind: input, shape index: {}]
  %s3 = inlined_call_operand.vmem [shape: f32[16,16], index: 3, kind: input, shape index: {}]
  %s4 = inlined_call_operand.vmem [shape: f32[3,3,128], index: 4, kind: input, shape index: {}]
  %s5 = inlined_call_operand.vmem [shape: f32[1,128], index: 5, kind: input, shape index: {}]
  %s6 = inlined_call_operand.vmem [shape: f32[128,2], index: 6, kind: input, shape index: {}]
  %s7 = inlined_call_operand.vmem [shape: f32[1,2], index: 7, kind: input, shape index: {}]
  %s8 = inlined_call_operand.vmem [shape: f32[2,128], index: 8, kind: input, shape index: {}]
  %s9 = inlined_call_operand.vmem [shape: f32[1,128], index: 9, kind: input, shape index: {}]
  %s10 = inlined_call_operand.vmem [shape: f32[128,128], index: 10, kind: input, shape index: {}]
  %s11 = inlined_call_operand.vmem [shape: f32[1,128], index: 11, kind: input, shape index: {}]
  %s12 = inlined_call_operand.vmem [shape: f32[32,128], index: 12, kind: output, shape index: {}]
  %s13 = sld [smem:[#allocation0]]
  $region81: #{depthwise_separable_conv.1} parent=0
    _
  %s15 = ssub.s32 1, %s13
  %s16 = scalar_select 0, %s15, %s13
  loop: start=0, step=1, limit=4
  $region2: #{depthwise_separable_conv.1} parent=0 // loop_pre_header
    _
  $region3: #{depthwise_separable_conv.1} parent=0 // loop_header
    %s18 = sphi 0, %s22
    %p19 = scmp.ge.s32.totalorder %s18, 4
    %s28 = sphi 0, %s30
    %s31 = sphi 0, %s28
    %s32 = sphi 0, %s31
    %s48 = sphi 0, %s32
    %s52 = sphi 0, %s52
    %s54 = sphi 0, %s52
    %s55 = sphi 0, %s54
    %s69 = sphi 0, %s55
    %s73 = sphi 0, %s73
    %s75 = sphi 0, %s73
    %s76 = sphi 0, %s75
    %s90 = sphi 0, %s76
    %s94 = sphi 0, %s94
    %s96 = sphi 0, %s94
    %s97 = sphi 0, %s96
    %s111 = sphi 0, %s97
    %s115 = sphi 0, %s115
    %s117 = sphi 0, %s115
    %s118 = sphi 0, %s117
    %s132 = sphi 0, %s118
    %s136 = sphi 0, %s136
    %s138 = sphi 0, %s136
    %s139 = sphi 0, %s138
    %s153 = sphi 0, %s139
    %s157 = sphi 0, %s157
    %s159 = sphi 0, %s157
    %s160 = sphi 0, %s159
    %s174 = sphi 0, %s160
    %s178 = sphi 0, %s178
    %s180 = sphi 0, %s178
    %s181 = sphi 0, %s180
    %s195 = sphi 0, %s181
    %s199 = sphi 0, %s199
    %s201 = sphi 0, %s199
    %s202 = sphi 0, %s201
    %s216 = sphi 0, %s202
    %s220 = sphi 0, %s220
    %s222 = sphi 0, %s220
    %s223 = sphi 0, %s222
    %s237 = sphi 0, %s223
    %s241 = sphi 0, %s241
    %s243 = sphi 0, %s241
    %s244 = sphi 0, %s243
    %s258 = sphi 0, %s244
    %s262 = sphi 0, %s262
    %s264 = sphi 0, %s262
    %s265 = sphi 0, %s264
    %s279 = sphi 0, %s265
    %s285 = sphi 0, %s287
    %s288 = sphi 0, %s285
    %s289 = sphi 0, %s288
    %s305 = sphi 0, %s289
  $region4: #{depthwise_separable_conv.1} parent=0 // loop_header_branch
    %21 = sbr.rel (%p19) target = $region8
  $region5: #{depthwise_separable_conv.1} parent=0 // loop_body
    %s23 = ssub.s32 %s18, 1
    %s24 = ssub.s32 %s18, 2
    %s25 = sadd.s32 %s18, 1
    %s26 = ssub.s32 %s18, %s25
    %p27 = scmp.eq.s32.totalorder %s26, 0
    %s29 = sadd.s32 %s28, 1
    %s30 = scalar_select %p27, %s28, %s29
    %p33 = pneg %p27
    %p34 = scmp.eq.s32.totalorder %s18, 1
    %p35 = por %p33, %p34
    %p36 = scmp.ne.s32.totalorder %s28, %s31
    %p37 = scmp.eq.s32.totalorder %s18, 0
    %p38 = por %p36, %p37
    %p39 = scmp.ne.s32.totalorder %s28, %s31
    %p40 = scmp.eq.s32.totalorder %s23, 1
    %p41 = por %p39, %p40
    %p42 = scmp.ne.s32.totalorder %s31, %s32
    %p43 = scmp.eq.s32.totalorder %s23, 0
    %p44 = por %p42, %p43
    %p45 = scmp.ne.s32.totalorder %s31, %s32
    %p46 = scmp.eq.s32.totalorder %s24, 1
    %p47 = por %p45, %p46
    %p49 = scmp.ne.s32.totalorder %s32, %s48
    %p50 = scmp.eq.s32.totalorder %s24, 0
    %p51 = por %p49, %p50
    %s53 = sadd.s32 %s52, 1
    %p56 = scmp.eq.s32.totalorder %s18, 1
    %p57 = scmp.ne.s32.totalorder %s52, %s54
    %p58 = scmp.eq.s32.totalorder %s18, 0
    %p59 = por %p57, %p58
    %p60 = scmp.ne.s32.totalorder %s52, %s54
    %p61 = scmp.eq.s32.totalorder %s23, 1
    %p62 = por %p60, %p61
    %p63 = scmp.ne.s32.totalorder %s54, %s55
    %p64 = scmp.eq.s32.totalorder %s23, 0
    %p65 = por %p63, %p64
    %p66 = scmp.ne.s32.totalorder %s54, %s55
    %p67 = scmp.eq.s32.totalorder %s24, 1
    %p68 = por %p66, %p67
    %p70 = scmp.ne.s32.totalorder %s55, %s69
    %p71 = scmp.eq.s32.totalorder %s24, 0
    %p72 = por %p70, %p71
    %s74 = sadd.s32 %s73, 1
    %p77 = scmp.eq.s32.totalorder %s18, 1
    %p78 = scmp.ne.s32.totalorder %s73, %s75
    %p79 = scmp.eq.s32.totalorder %s18, 0
    %p80 = por %p78, %p79
    %p81 = scmp.ne.s32.totalorder %s73, %s75
    %p82 = scmp.eq.s32.totalorder %s23, 1
    %p83 = por %p81, %p82
    %p84 = scmp.ne.s32.totalorder %s75, %s76
    %p85 = scmp.eq.s32.totalorder %s23, 0
    %p86 = por %p84, %p85
    %p87 = scmp.ne.s32.totalorder %s75, %s76
    %p88 = scmp.eq.s32.totalorder %s24, 1
    %p89 = por %p87, %p88
    %p91 = scmp.ne.s32.totalorder %s76, %s90
    %p92 = scmp.eq.s32.totalorder %s24, 0
    %p93 = por %p91, %p92
    %s95 = sadd.s32 %s94, 1
    %p98 = scmp.eq.s32.totalorder %s18, 1
    %p99 = scmp.ne.s32.totalorder %s94, %s96
    %p100 = scmp.eq.s32.totalorder %s18, 0
    %p101 = por %p99, %p100
    %p102 = scmp.ne.s32.totalorder %s94, %s96
    %p103 = scmp.eq.s32.totalorder %s23, 1
    %p104 = por %p102, %p103
    %p105 = scmp.ne.s32.totalorder %s96, %s97
    %p106 = scmp.eq.s32.totalorder %s23, 0
    %p107 = por %p105, %p106
    %p108 = scmp.ne.s32.totalorder %s96, %s97
    %p109 = scmp.eq.s32.totalorder %s24, 1
    %p110 = por %p108, %p109
    %p112 = scmp.ne.s32.totalorder %s97, %s111
    %p113 = scmp.eq.s32.totalorder %s24, 0
    %p114 = por %p112, %p113
    %s116 = sadd.s32 %s115, 1
    %p119 = scmp.eq.s32.totalorder %s18, 1
    %p120 = scmp.ne.s32.totalorder %s115, %s117
    %p121 = scmp.eq.s32.totalorder %s18, 0
    %p122 = por %p120, %p121
    %p123 = scmp.ne.s32.totalorder %s115, %s117
    %p124 = scmp.eq.s32.totalorder %s23, 1
    %p125 = por %p123, %p124
    %p126 = scmp.ne.s32.totalorder %s117, %s118
    %p127 = scmp.eq.s32.totalorder %s23, 0
    %p128 = por %p126, %p127
    %p129 = scmp.ne.s32.totalorder %s117, %s118
    %p130 = scmp.eq.s32.totalorder %s24, 1
    %p131 = por %p129, %p130
    %p133 = scmp.ne.s32.totalorder %s118, %s132
    %p134 = scmp.eq.s32.totalorder %s24, 0
    %p135 = por %p133, %p134
    %s137 = sadd.s32 %s136, 1
    %p140 = scmp.eq.s32.totalorder %s18, 1
    %p141 = scmp.ne.s32.totalorder %s136, %s138
    %p142 = scmp.eq.s32.totalorder %s18, 0
    %p143 = por %p141, %p142
    %p144 = scmp.ne.s32.totalorder %s136, %s138
    %p145 = scmp.eq.s32.totalorder %s23, 1
    %p146 = por %p144, %p145
    %p147 = scmp.ne.s32.totalorder %s138, %s139
    %p148 = scmp.eq.s32.totalorder %s23, 0
    %p149 = por %p147, %p148
    %p150 = scmp.ne.s32.totalorder %s138, %s139
    %p151 = scmp.eq.s32.totalorder %s24, 1
    %p152 = por %p150, %p151
    %p154 = scmp.ne.s32.totalorder %s139, %s153
    %p155 = scmp.eq.s32.totalorder %s24, 0
    %p156 = por %p154, %p155
    %s158 = sadd.s32 %s157, 1
    %p161 = scmp.eq.s32.totalorder %s18, 1
    %p162 = scmp.ne.s32.totalorder %s157, %s159
    %p163 = scmp.eq.s32.totalorder %s18, 0
    %p164 = por %p162, %p163
    %p165 = scmp.ne.s32.totalorder %s157, %s159
    %p166 = scmp.eq.s32.totalorder %s23, 1
    %p167 = por %p165, %p166
    %p168 = scmp.ne.s32.totalorder %s159, %s160
    %p169 = scmp.eq.s32.totalorder %s23, 0
    %p170 = por %p168, %p169
    %p171 = scmp.ne.s32.totalorder %s159, %s160
    %p172 = scmp.eq.s32.totalorder %s24, 1
    %p173 = por %p171, %p172
    %p175 = scmp.ne.s32.totalorder %s160, %s174
    %p176 = scmp.eq.s32.totalorder %s24, 0
    %p177 = por %p175, %p176
    %s179 = sadd.s32 %s178, 1
    %p182 = scmp.eq.s32.totalorder %s18, 1
    %p183 = scmp.ne.s32.totalorder %s178, %s180
    %p184 = scmp.eq.s32.totalorder %s18, 0
    %p185 = por %p183, %p184
    %p186 = scmp.ne.s32.totalorder %s178, %s180
    %p187 = scmp.eq.s32.totalorder %s23, 1
    %p188 = por %p186, %p187
    %p189 = scmp.ne.s32.totalorder %s180, %s181
    %p190 = scmp.eq.s32.totalorder %s23, 0
    %p191 = por %p189, %p190
    %p192 = scmp.ne.s32.totalorder %s180, %s181
    %p193 = scmp.eq.s32.totalorder %s24, 1
    %p194 = por %p192, %p193
    %p196 = scmp.ne.s32.totalorder %s181, %s195
    %p197 = scmp.eq.s32.totalorder %s24, 0
    %p198 = por %p196, %p197
    %s200 = sadd.s32 %s199, 1
    %p203 = scmp.eq.s32.totalorder %s18, 1
    %p204 = scmp.ne.s32.totalorder %s199, %s201
    %p205 = scmp.eq.s32.totalorder %s18, 0
    %p206 = por %p204, %p205
    %p207 = scmp.ne.s32.totalorder %s199, %s201
    %p208 = scmp.eq.s32.totalorder %s23, 1
    %p209 = por %p207, %p208
    %p210 = scmp.ne.s32.totalorder %s201, %s202
    %p211 = scmp.eq.s32.totalorder %s23, 0
    %p212 = por %p210, %p211
    %p213 = scmp.ne.s32.totalorder %s201, %s202
    %p214 = scmp.eq.s32.totalorder %s24, 1
    %p215 = por %p213, %p214
    %p217 = scmp.ne.s32.totalorder %s202, %s216
    %p218 = scmp.eq.s32.totalorder %s24, 0
    %p219 = por %p217, %p218
    %s221 = sadd.s32 %s220, 1
    %p224 = scmp.eq.s32.totalorder %s18, 1
    %p225 = scmp.ne.s32.totalorder %s220, %s222
    %p226 = scmp.eq.s32.totalorder %s18, 0
    %p227 = por %p225, %p226
    %p228 = scmp.ne.s32.totalorder %s220, %s222
    %p229 = scmp.eq.s32.totalorder %s23, 1
    %p230 = por %p228, %p229
    %p231 = scmp.ne.s32.totalorder %s222, %s223
    %p232 = scmp.eq.s32.totalorder %s23, 0
    %p233 = por %p231, %p232
    %p234 = scmp.ne.s32.totalorder %s222, %s223
    %p235 = scmp.eq.s32.totalorder %s24, 1
    %p236 = por %p234, %p235
    %p238 = scmp.ne.s32.totalorder %s223, %s237
    %p239 = scmp.eq.s32.totalorder %s24, 0
    %p240 = por %p238, %p239
    %s242 = sadd.s32 %s241, 1
    %p245 = scmp.eq.s32.totalorder %s18, 1
    %p246 = scmp.ne.s32.totalorder %s241, %s243
    %p247 = scmp.eq.s32.totalorder %s18, 0
    %p248 = por %p246, %p247
    %p249 = scmp.ne.s32.totalorder %s241, %s243
    %p250 = scmp.eq.s32.totalorder %s23, 1
    %p251 = por %p249, %p250
    %p252 = scmp.ne.s32.totalorder %s243, %s244
    %p253 = scmp.eq.s32.totalorder %s23, 0
    %p254 = por %p252, %p253
    %p255 = scmp.ne.s32.totalorder %s243, %s244
    %p256 = scmp.eq.s32.totalorder %s24, 1
    %p257 = por %p255, %p256
    %p259 = scmp.ne.s32.totalorder %s244, %s258
    %p260 = scmp.eq.s32.totalorder %s24, 0
    %p261 = por %p259, %p260
    %s263 = sadd.s32 %s262, 1
    %p266 = scmp.eq.s32.totalorder %s18, 1
    %p267 = scmp.ne.s32.totalorder %s262, %s264
    %p268 = scmp.eq.s32.totalorder %s18, 0
    %p269 = por %p267, %p268
    %p270 = scmp.ne.s32.totalorder %s262, %s264
    %p271 = scmp.eq.s32.totalorder %s23, 1
    %p272 = por %p270, %p271
    %p273 = scmp.ne.s32.totalorder %s264, %s265
    %p274 = scmp.eq.s32.totalorder %s23, 0
    %p275 = por %p273, %p274
    %p276 = scmp.ne.s32.totalorder %s264, %s265
    %p277 = scmp.eq.s32.totalorder %s24, 1
    %p278 = por %p276, %p277
    %p280 = scmp.ne.s32.totalorder %s265, %s279
    %p281 = scmp.eq.s32.totalorder %s24, 0
    %p282 = por %p280, %p281
    %s283 = ssub.s32 %s18, %s25
    %p284 = scmp.eq.s32.totalorder %s283, 0
    %s286 = sadd.s32 %s285, 1
    %s287 = scalar_select %p284, %s285, %s286
    %p290 = pneg %p284
    %p291 = scmp.eq.s32.totalorder %s18, 1
    %p292 = por %p290, %p291
    %p293 = scmp.ne.s32.totalorder %s285, %s288
    %p294 = scmp.eq.s32.totalorder %s18, 0
    %p295 = por %p293, %p294
    %p296 = scmp.ne.s32.totalorder %s285, %s288
    %p297 = scmp.eq.s32.totalorder %s23, 1
    %p298 = por %p296, %p297
    %p299 = scmp.ne.s32.totalorder %s288, %s289
    %p300 = scmp.eq.s32.totalorder %s23, 0
    %p301 = por %p299, %p300
    %p302 = scmp.ne.s32.totalorder %s288, %s289
    %p303 = scmp.eq.s32.totalorder %s24, 1
    %p304 = por %p302, %p303
    %p306 = scmp.ne.s32.totalorder %s289, %s305
    %p307 = scmp.eq.s32.totalorder %s24, 0
    %p308 = por %p306, %p307
    %p309 = scmp.le.s32.totalorder 1, %s18
    %p310 = scmp.lt.s32.totalorder %s18, 3
    %p311 = pnand %p309, %p310
    %p312 = pneg %p311
    // Predicated region
    $region9: #{depthwise_separable_conv.1} parent=5 // pred_check
      _
    $region10: #{depthwise_separable_conv.1} parent=5 // pred_check_branch
      %314 = sbr.rel (%p311) target = $region12
    $region11: #{depthwise_separable_conv.1} parent=5 // pred_region
      %s315 = ssub.s32 %s18, 1
      // Predicated region
      $region13: #{depthwise_separable_conv.1} parent=11 // pred_check
        %p316 = pneg %p65
      $region14: #{depthwise_separable_conv.1} parent=11 // pred_check_branch
        %318 = sbr.rel (%p316) target = $region16
      $region15: #{depthwise_separable_conv.1} parent=11 // pred_region
        _
      $region16: #{depthwise_separable_conv.1} parent=11 // pred_fallthru
        _
      // Predicated region
      $region17: #{depthwise_separable_conv.1} parent=11 // pred_check
        %p319 = pneg %p86
      $region18: #{depthwise_separable_conv.1} parent=11 // pred_check_branch
        %321 = sbr.rel (%p319) target = $region20
      $region19: #{depthwise_separable_conv.1} parent=11 // pred_region
        _
      $region20: #{depthwise_separable_conv.1} parent=11 // pred_fallthru
        _
      // Predicated region
      $region21: #{depthwise_separable_conv.1} parent=11 // pred_check
        %p322 = pneg %p107
      $region22: #{depthwise_separable_conv.1} parent=11 // pred_check_branch
        %324 = sbr.rel (%p322) target = $region24
      $region23: #{depthwise_separable_conv.1} parent=11 // pred_region
        _
      $region24: #{depthwise_separable_conv.1} parent=11 // pred_fallthru
        _
      // Predicated region
      $region25: #{depthwise_separable_conv.1} parent=11 // pred_check
        %p325 = pneg %p128
      $region26: #{depthwise_separable_conv.1} parent=11 // pred_check_branch
        %327 = sbr.rel (%p325) target = $region28
      $region27: #{depthwise_separable_conv.1} parent=11 // pred_region
        _
      $region28: #{depthwise_separable_conv.1} parent=11 // pred_fallthru
        _
      // Predicated region
      $region29: #{depthwise_separable_conv.1} parent=11 // pred_check
        %p328 = pneg %p149
      $region30: #{depthwise_separable_conv.1} parent=11 // pred_check_branch
        %330 = sbr.rel (%p328) target = $region32
      $region31: #{depthwise_separable_conv.1} parent=11 // pred_region
        _
      $region32: #{depthwise_separable_conv.1} parent=11 // pred_fallthru
        _
      // Predicated region
      $region33: #{depthwise_separable_conv.1} parent=11 // pred_check
        %p331 = pneg %p170
      $region34: #{depthwise_separable_conv.1} parent=11 // pred_check_branch
        %333 = sbr.rel (%p331) target = $region36
      $region35: #{depthwise_separable_conv.1} parent=11 // pred_region
        _
      $region36: #{depthwise_separable_conv.1} parent=11 // pred_fallthru
        _
      // Predicated region
      $region37: #{depthwise_separable_conv.1} parent=11 // pred_check
        %p334 = pneg %p191
      $region38: #{depthwise_separable_conv.1} parent=11 // pred_check_branch
        %336 = sbr.rel (%p334) target = $region40
      $region39: #{depthwise_separable_conv.1} parent=11 // pred_region
        _
      $region40: #{depthwise_separable_conv.1} parent=11 // pred_fallthru
        _
      // Predicated region
      $region41: #{depthwise_separable_conv.1} parent=11 // pred_check
        %p337 = pneg %p212
      $region42: #{depthwise_separable_conv.1} parent=11 // pred_check_branch
        %339 = sbr.rel (%p337) target = $region44
      $region43: #{depthwise_separable_conv.1} parent=11 // pred_region
        _
      $region44: #{depthwise_separable_conv.1} parent=11 // pred_fallthru
        _
      // Predicated region
      $region45: #{depthwise_separable_conv.1} parent=11 // pred_check
        %p340 = pneg %p233
      $region46: #{depthwise_separable_conv.1} parent=11 // pred_check_branch
        %342 = sbr.rel (%p340) target = $region48
      $region47: #{depthwise_separable_conv.1} parent=11 // pred_region
        _
      $region48: #{depthwise_separable_conv.1} parent=11 // pred_fallthru
        _
      // Predicated region
      $region49: #{depthwise_separable_conv.1} parent=11 // pred_check
        %p343 = pneg %p254
      $region50: #{depthwise_separable_conv.1} parent=11 // pred_check_branch
        %345 = sbr.rel (%p343) target = $region52
      $region51: #{depthwise_separable_conv.1} parent=11 // pred_region
        _
      $region52: #{depthwise_separable_conv.1} parent=11 // pred_fallthru
        _
      // Predicated region
      $region53: #{depthwise_separable_conv.1} parent=11 // pred_check
        %p346 = pneg %p275
      $region54: #{depthwise_separable_conv.1} parent=11 // pred_check_branch
        %348 = sbr.rel (%p346) target = $region56
      $region55: #{depthwise_separable_conv.1} parent=11 // pred_region
        _
      $region56: #{depthwise_separable_conv.1} parent=11 // pred_fallthru
        _
    $region12: #{depthwise_separable_conv.1} parent=5 // pred_fallthru
      _
    %p349 = scmp.lt.s32.totalorder %s18, 2
    // Predicated region
    $region57: #{depthwise_separable_conv.1} parent=5 // pred_check
      %p350 = pneg %p349
    $region58: #{depthwise_separable_conv.1} parent=5 // pred_check_branch
      %352 = sbr.rel (%p350) target = $region60
    $region59: #{depthwise_separable_conv.1} parent=5 // pred_region
      // Predicated region
      $region61: #{depthwise_separable_conv.1} parent=59 // pred_check
        %p353 = pneg %p38
      $region62: #{depthwise_separable_conv.1} parent=59 // pred_check_branch
        %355 = sbr.rel (%p353) target = $region64
      $region63: #{depthwise_separable_conv.1} parent=59 // pred_region
        %s356 = smul.u32 2, %s18
        %p357 = scmp.lt.s32.totalorder %s356, 3
        %s358 = scalar_select %p357, %s356, 3
        %s359 = smul.addr %s358, 8
        %s360 = scalar_lea.vmem %s0, %s359
        %s361 = smul.u32 2, %s18
      $region64: #{depthwise_separable_conv.1} parent=59 // pred_fallthru
        _
    $region60: #{depthwise_separable_conv.1} parent=5 // pred_fallthru
      _
    %p362 = scmp.le.s32.totalorder 1, %s18
    %p363 = scmp.lt.s32.totalorder %s18, 3
    %p364 = pnand %p362, %p363
    %p365 = pneg %p364
    // Predicated region
    $region65: #{depthwise_separable_conv.1} parent=5 // pred_check
      _
    $region66: #{depthwise_separable_conv.1} parent=5 // pred_check_branch
      %367 = sbr.rel (%p364) target = $region68
    $region67: #{depthwise_separable_conv.1} parent=5 // pred_region
      %s368 = ssub.s32 %s18, 1
      %s369 = smul.u32 2, %s23
      %p370 = scmp.lt.s32.totalorder %s369, 3
      %s371 = scalar_select %p370, %s369, 3
      %s372 = smul.addr %s371, 8
      %s373 = scalar_lea.vmem %s0, %s372
      %p374 = pneg %p44
      %p375 = pneg %p41
      %p376 = pneg %p65
      %p377 = pneg %p62
      %p378 = pneg %p86
      %p379 = pneg %p83
      %p380 = pneg %p107
      %p381 = pneg %p104
      %p382 = pneg %p128
      %p383 = pneg %p125
      %p384 = pneg %p149
      %p385 = pneg %p146
      %p386 = pneg %p170
      %p387 = pneg %p167
      %p388 = pneg %p191
      %p389 = pneg %p188
      %p390 = pneg %p212
      %p391 = pneg %p209
      %p392 = pneg %p233
      %p393 = pneg %p230
      %p394 = pneg %p254
      %p395 = pneg %p251
      %p396 = pneg %p275
      %p397 = pneg %p272
      %p398 = pneg %p301
      %p399 = pneg %p298
      %s400 = smul.u32 2, %s23
      %p401 = scmp.lt.s32.totalorder %s400, 3
      %s402 = scalar_select %p401, %s400, 3
      %s403 = smul.addr %s402, 8
      %s404 = scalar_lea.vmem %s12, %s403
      %s405 = smul.u32 2, %s23
      %p406 = scmp.lt.s32.totalorder %s405, 3
      %s407 = scalar_select %p406, %s405, 3
      %s408 = smul.addr %s407, 8
      %s409 = scalar_lea.vmem %s0, %s408
      %s410 = smul.u32 2, %s23
      %s411 = smul.u32 2, %s23
      %p412 = scmp.lt.s32.totalorder %s411, 3
      %s413 = scalar_select %p412, %s411, 3
      %s414 = smul.addr %s413, 8
      %s415 = scalar_lea.vmem %s12, %s414
      %s416 = smul.u32 2, %s23
      %v417 = vld [vmem:[%s409] sm:$0xff]
      %v418 = vld [vmem:[%s409 + $0x8] sm:$0xff]
      %v419 = vrot.slane %v417, 7
      %v420 = vrot.slane %v418, 7
      %v421 = vlaneseq
      %v422 = vshrl.u32 %v421, 7
      %vm423 = vcmp.lt.s32.totalorder %v422, 1
      %v424 = vsel %vm423, %v419, %v420
      %v425 = vsel %vm423, %v420, %v419
      %v426 = vld [vmem:[%s1] sm:$0xff]
      %v427 = vld [vmem:[%s1 + $0x8] sm:$0xff]
      %429 = vset.pattern.permute.xlu0 0
      %430 = vperm.xlu0 %429, %v426
      %v431 = vpop.permute.xlu0 %430
      %434 = vset.pattern.permute.xlu0 0
      %435 = vperm.xlu0 %434, %v427
      %v436 = vpop.permute.xlu0 %435
      %v438 = vmul.f32 %v425, %v431
      %v439 = vmul.f32 %v424, %v436
      %v440 = vrot.slane %v417, 1
      %v441 = vrot.slane %v418, 1
      %vm442 = vcmp.lt.s32.totalorder %v422, 7
      %v443 = vsel %vm442, %v440, %v441
      %v444 = vsel %vm442, %v441, %v440
      %v445 = vld [vmem:[%s2] sm:$0xff]
      %v446 = vld [vmem:[%s2 + $0x8] sm:$0xff]
      %448 = vset.pattern.permute.xlu0 0
      %449 = vperm.xlu0 %448, %v445
      %v450 = vpop.permute.xlu0 %449
      %453 = vset.pattern.permute.xlu0 0
      %454 = vperm.xlu0 %453, %v446
      %v455 = vpop.permute.xlu0 %454
      %v457 = vmul.f32 %v443, %v450
      %v458 = vmul.f32 %v444, %v455
      %459 = vrot.lane.b32.xlu0 %v438, 8
      %v460 = vpop.permute.xlu0 %459
      %461 = vrot.lane.b32.xlu0 %v439, 8
      %v462 = vpop.permute.xlu0 %461
      %463 = vrot.lane.b32.xlu0 %v438, 120
      %v464 = vpop.permute.xlu0 %463
      %465 = vrot.lane.b32.xlu0 %v439, 120
      %v466 = vpop.permute.xlu0 %465
      %v467 = vld [vmem:[%s4] sm:$0x1]
      %v468 = vperm.slane %v467, 0
      %v469 = vmul.f32 %v460, %v468
      %v470 = vmul.f32 %v462, %v468
      %v471 = vld [vmem:[%s4 + $0x1] sm:$0x1]
      %v472 = vperm.slane %v471, 0
      %v473 = vmul.f32 %v438, %v472
      %v474 = vmul.f32 %v439, %v472
      %v475 = vadd.f32 %v469, %v473
      %v476 = vadd.f32 %v470, %v474
      %v477 = vld [vmem:[%s4 + $0x2] sm:$0x1]
      %v478 = vperm.slane %v477, 0
      %v479 = vmul.f32 %v464, %v478
      %v480 = vmul.f32 %v466, %v478
      %v481 = vadd.f32 %v475, %v479
      %v482 = vadd.f32 %v476, %v480
      %483 = vrot.lane.b32.xlu0 %v417, 8
      %v484 = vpop.permute.xlu0 %483
      %485 = vrot.lane.b32.xlu0 %v418, 8
      %v486 = vpop.permute.xlu0 %485
      %487 = vrot.lane.b32.xlu0 %v417, 120
      %v488 = vpop.permute.xlu0 %487
      %489 = vrot.lane.b32.xlu0 %v418, 120
      %v490 = vpop.permute.xlu0 %489
      %s491 = scalar_lea.vmem %s4, 4
      %v492 = vld [vmem:[%s491] sm:$0x1]
      %v493 = vperm.slane %v492, 0
      %v494 = vmul.f32 %v484, %v493
      %v495 = vmul.f32 %v486, %v493
      %v496 = vld [vmem:[%s491 + $0x1] sm:$0x1]
      %v497 = vperm.slane %v496, 0
      %v498 = vmul.f32 %v417, %v497
      %v499 = vmul.f32 %v418, %v497
      %v500 = vadd.f32 %v494, %v498
      %v501 = vadd.f32 %v495, %v499
      %v502 = vld [vmem:[%s491 + $0x2] sm:$0x1]
      %v503 = vperm.slane %v502, 0
      %v504 = vmul.f32 %v488, %v503
      %v505 = vmul.f32 %v490, %v503
      %v506 = vadd.f32 %v500, %v504
      %v507 = vadd.f32 %v501, %v505
      %v508 = vadd.f32 %v481, %v506
      %v509 = vadd.f32 %v482, %v507
      %510 = vrot.lane.b32.xlu0 %v457, 8
      %v511 = vpop.permute.xlu0 %510
      %512 = vrot.lane.b32.xlu0 %v458, 8
      %v513 = vpop.permute.xlu0 %512
      %514 = vrot.lane.b32.xlu0 %v457, 120
      %v515 = vpop.permute.xlu0 %514
      %516 = vrot.lane.b32.xlu0 %v458, 120
      %v517 = vpop.permute.xlu0 %516
      %s518 = scalar_lea.vmem %s4, 8
      %v519 = vld [vmem:[%s518] sm:$0x1]
      %v520 = vperm.slane %v519, 0
      %v521 = vmul.f32 %v511, %v520
      %v522 = vmul.f32 %v513, %v520
      %v523 = vld [vmem:[%s518 + $0x1] sm:$0x1]
      %v524 = vperm.slane %v523, 0
      %v525 = vmul.f32 %v457, %v524
      %v526 = vmul.f32 %v458, %v524
      %v527 = vadd.f32 %v521, %v525
      %v528 = vadd.f32 %v522, %v526
      %v529 = vld [vmem:[%s518 + $0x2] sm:$0x1]
      %v530 = vperm.slane %v529, 0
      %v531 = vmul.f32 %v515, %v530
      %v532 = vmul.f32 %v517, %v530
      %v533 = vadd.f32 %v527, %v531
      %v534 = vadd.f32 %v528, %v532
      %v535 = vadd.f32 %v508, %v533
      %v536 = vadd.f32 %v509, %v534
      %v537 = vld [vmem:[%s5] sm:$0x1]
      %v539 = vperm.slane %v537, 0
      %v541 = vadd.f32 %v535, %v539
      %v542 = vadd.f32 %v536, %v539
      %v543 = vmax.f32 %v541, 0.0
      %v544 = vmax.f32 %v542, 0.0
      %v545 = vld [vmem:[%s3] sm:$0xff]
      %v546 = vld [vmem:[%s3 + $0x8] sm:$0xff]
      %vm547 = vcmask 130048
      %v549 = vsel %vm547, %v545, 0
      %v552 = vsel %vm547, %v546, 0
      %554 = vmatpush.msra.mxu0 0.0
      %555 = vmatpush.msra.mxu0 0.0
      %556 = vmatpush.msra.mxu0 0.0
      %557 = vmatpush.msra.mxu0 0.0
      %558 = vmatpush.msra.mxu0 0.0
      %559 = vmatpush.msra.mxu0 0.0
      %560 = vmatpush.msra.mxu0 0.0
      %561 = vmatpush.msra.mxu0 0.0
      %562 = vmatpush.msra.mxu0 0.0
      %563 = vmatpush.msra.mxu0 0.0
      %564 = vmatpush.msra.mxu0 0.0
      %565 = vmatpush.msra.mxu0 0.0
      %566 = vmatpush.msra.mxu0 0.0
      %567 = vmatpush.msra.mxu0 0.0
      %568 = vmatpush.msra.mxu0 %v544
      %569 = vmatpush.msra.mxu0 %v543
      %570 = vmatmul.f32.gmra.mxu0 %v549
      %v571 = vpop.f32.mrf.mxu0
      %v572 = vadd.f32 0.0, %v571
      %573 = vmatmul.f32.gmra.mxu0 %v552
      %v574 = vpop.f32.mrf.mxu0
      %v575 = vadd.f32 0.0, %v574
      %576 = vdwg.mxu0
      %577 = vrot.lane.b32.xlu0 %v572, 8
      %v578 = vpop.permute.xlu0 %577
      %579 = vrot.lane.b32.xlu0 %v575, 8
      %v580 = vpop.permute.xlu0 %579
      %v581 = vadd.f32 %v572, %v578
      %v582 = vadd.f32 %v575, %v580
      %583 = vrot.lane.b32.xlu0 %v581, 16
      %v584 = vpop.permute.xlu0 %583
      %585 = vrot.lane.b32.xlu0 %v582, 16
      %v586 = vpop.permute.xlu0 %585
      %v587 = vadd.f32 %v581, %v584
      %v588 = vadd.f32 %v582, %v586
      %589 = vrot.lane.b32.xlu0 %v587, 32
      %v590 = vpop.permute.xlu0 %589
      %591 = vrot.lane.b32.xlu0 %v588, 32
      %v592 = vpop.permute.xlu0 %591
      %v593 = vadd.f32 %v587, %v590
      %v594 = vadd.f32 %v588, %v592
      %595 = vrot.lane.b32.xlu0 %v593, 64
      %v596 = vpop.permute.xlu0 %595
      %597 = vrot.lane.b32.xlu0 %v594, 64
      %v598 = vpop.permute.xlu0 %597
      %v599 = vadd.f32 %v593, %v596
      %v600 = vadd.f32 %v594, %v598
      %v601 = vld [vmem:[%s6] sm:$0xff]
      %v602 = vld [vmem:[%s6 + $0x8] sm:$0xff]
      %v603 = vld [vmem:[%s6 + $0x10] sm:$0xff]
      %v604 = vld [vmem:[%s6 + $0x18] sm:$0xff]
      %v605 = vld [vmem:[%s6 + $0x20] sm:$0xff]
      %v606 = vld [vmem:[%s6 + $0x28] sm:$0xff]
      %v607 = vld [vmem:[%s6 + $0x30] sm:$0xff]
      %v608 = vld [vmem:[%s6 + $0x38] sm:$0xff]
      %v609 = vld [vmem:[%s6 + $0x40] sm:$0xff]
      %v610 = vld [vmem:[%s6 + $0x48] sm:$0xff]
      %v611 = vld [vmem:[%s6 + $0x50] sm:$0xff]
      %v612 = vld [vmem:[%s6 + $0x58] sm:$0xff]
      %v613 = vld [vmem:[%s6 + $0x60] sm:$0xff]
      %v614 = vld [vmem:[%s6 + $0x68] sm:$0xff]
      %v615 = vld [vmem:[%s6 + $0x70] sm:$0xff]
      %v616 = vld [vmem:[%s6 + $0x78] sm:$0xff]
      %v617 = vld [vmem:[%s7] sm:$0x1]
      %v619 = vperm.slane %v617, 0
      %621 = vmatpush.msra.mxu0 %v616
      %622 = vmatpush.msra.mxu0 %v615
      %623 = vmatpush.msra.mxu0 %v614
      %624 = vmatpush.msra.mxu0 %v613
      %625 = vmatpush.msra.mxu0 %v612
      %626 = vmatpush.msra.mxu0 %v611
      %627 = vmatpush.msra.mxu0 %v610
      %628 = vmatpush.msra.mxu0 %v609
      %629 = vmatpush.msra.mxu0 %v608
      %630 = vmatpush.msra.mxu0 %v607
      %631 = vmatpush.msra.mxu0 %v606
      %632 = vmatpush.msra.mxu0 %v605
      %633 = vmatpush.msra.mxu0 %v604
      %634 = vmatpush.msra.mxu0 %v603
      %635 = vmatpush.msra.mxu0 %v602
      %636 = vmatpush.msra.mxu0 %v601
      %637 = vmatmul.f32.gmra.mxu0 %v599
      %v638 = vpop.f32.mrf.mxu0
      %v639 = vadd.f32 %v619, %v638
      %640 = vmatmul.f32.gmra.mxu0 %v600
      %v641 = vpop.f32.mrf.mxu0
      %v642 = vadd.f32 %v619, %v641
      %643 = vdwg.mxu0
      %v644 = vmax.f32 %v639, 0.0
      %v645 = vmax.f32 %v642, 0.0
      %v646 = vld [vmem:[%s8] sm:$0x3]
      %v647 = vld [vmem:[%s9] sm:$0x1]
      %v649 = vperm.slane %v647, 0
      %vm651 = vcmask 15360
      %v653 = vsel %vm651, %v644, 0
      %v656 = vsel %vm651, %v645, 0
      %vm658 = vcmask 1041408
      %v660 = vsel %vm658, %v646, 0
      %662 = vmatpush.msra.mxu0 0.0
      %663 = vmatpush.msra.mxu0 0.0
      %664 = vmatpush.msra.mxu0 0.0
      %665 = vmatpush.msra.mxu0 0.0
      %666 = vmatpush.msra.mxu0 0.0
      %667 = vmatpush.msra.mxu0 0.0
      %668 = vmatpush.msra.mxu0 0.0
      %669 = vmatpush.msra.mxu0 0.0
      %670 = vmatpush.msra.mxu0 0.0
      %671 = vmatpush.msra.mxu0 0.0
      %672 = vmatpush.msra.mxu0 0.0
      %673 = vmatpush.msra.mxu0 0.0
      %674 = vmatpush.msra.mxu0 0.0
      %675 = vmatpush.msra.mxu0 0.0
      %676 = vmatpush.msra.mxu0 0.0
      %677 = vmatpush.msra.mxu0 %v660
      %678 = vmatmul.f32.gmra.mxu0 %v653
      %v679 = vpop.f32.mrf.mxu0
      %v680 = vadd.f32 %v649, %v679
      %681 = vmatmul.f32.gmra.mxu0 %v656
      %v682 = vpop.f32.mrf.mxu0
      %v683 = vadd.f32 %v649, %v682
      %684 = vdwg.mxu0
      %v685 = vxor.u32 %v680, 2147483648
      %v686 = vxor.u32 %v683, 2147483648
      %v687 = vmul.f32 %v685, 1.442695
      %v688 = vpow.pop %v687
      %v689 = vmul.f32 %v686, 1.442695
      %v690 = vpow.pop %v689
      %v691 = vadd.f32 %v688, 1.0
      %v692 = vadd.f32 %v690, 1.0
      %v693 = vrcp.pop %v691
      %v694 = vmul.f32 %v691, %v693
      %v695 = vsub.f32 1.0, %v694
      %v696 = vmul.f32 %v693, %v695
      %v697 = vadd.f32 %v693, %v696
      %vm698 = vweird.f32 %v691
      %vm699 = vweird.f32 %v693
      %vm700 = vmor %vm698, %vm699
      %v701 = vsel %vm700, %v693, %v697
      %v702 = vand.u32 2147483647, %v691
      %vm703 = vcmp.eq.f32.partialorder %v702, 8.507059e+37
      %v704 = vand.u32 %v691, 2147483648
      %v705 = vor.u32 1.1754944e-38, %v704
      %v706 = vsel %vm703, %v705, %v701
      %v707 = vmul.f32 1.0, %v706
      %v708 = vrcp.pop %v692
      %v709 = vmul.f32 %v692, %v708
      %v710 = vsub.f32 1.0, %v709
      %v711 = vmul.f32 %v708, %v710
      %v712 = vadd.f32 %v708, %v711
      %vm713 = vweird.f32 %v692
      %vm714 = vweird.f32 %v708
      %vm715 = vmor %vm713, %vm714
      %v716 = vsel %vm715, %v708, %v712
      %v717 = vand.u32 2147483647, %v692
      %vm718 = vcmp.eq.f32.partialorder %v717, 8.507059e+37
      %v719 = vand.u32 %v692, 2147483648
      %v720 = vor.u32 1.1754944e-38, %v719
      %v721 = vsel %vm718, %v720, %v716
      %v722 = vmul.f32 1.0, %v721
      %v723 = vmul.f32 %v543, %v707
      %v724 = vmul.f32 %v544, %v722
      %v725 = vld [vmem:[%s10] sm:$0xff]
      %v726 = vld [vmem:[%s10 + $0x8] sm:$0xff]
      %v727 = vld [vmem:[%s10 + $0x10] sm:$0xff]
      %v728 = vld [vmem:[%s10 + $0x18] sm:$0xff]
      %v729 = vld [vmem:[%s10 + $0x20] sm:$0xff]
      %v730 = vld [vmem:[%s10 + $0x28] sm:$0xff]
      %v731 = vld [vmem:[%s10 + $0x30] sm:$0xff]
      %v732 = vld [vmem:[%s10 + $0x38] sm:$0xff]
      %v733 = vld [vmem:[%s10 + $0x40] sm:$0xff]
      %v734 = vld [vmem:[%s10 + $0x48] sm:$0xff]
      %v735 = vld [vmem:[%s10 + $0x50] sm:$0xff]
      %v736 = vld [vmem:[%s10 + $0x58] sm:$0xff]
      %v737 = vld [vmem:[%s10 + $0x60] sm:$0xff]
      %v738 = vld [vmem:[%s10 + $0x68] sm:$0xff]
      %v739 = vld [vmem:[%s10 + $0x70] sm:$0xff]
      %v740 = vld [vmem:[%s10 + $0x78] sm:$0xff]
      %v741 = vld [vmem:[%s11] sm:$0x1]
      %v743 = vperm.slane %v741, 0
      %745 = vmatpush.msra.mxu0 %v740
      %746 = vmatpush.msra.mxu0 %v739
      %747 = vmatpush.msra.mxu0 %v738
      %748 = vmatpush.msra.mxu0 %v737
      %749 = vmatpush.msra.mxu0 %v736
      %750 = vmatpush.msra.mxu0 %v735
      %751 = vmatpush.msra.mxu0 %v734
      %752 = vmatpush.msra.mxu0 %v733
      %753 = vmatpush.msra.mxu0 %v732
      %754 = vmatpush.msra.mxu0 %v731
      %755 = vmatpush.msra.mxu0 %v730
      %756 = vmatpush.msra.mxu0 %v729
      %757 = vmatpush.msra.mxu0 %v728
      %758 = vmatpush.msra.mxu0 %v727
      %759 = vmatpush.msra.mxu0 %v726
      %760 = vmatpush.msra.mxu0 %v725
      %761 = vmatmul.f32.gmra.mxu0 %v723
      %v762 = vpop.f32.mrf.mxu0
      %v763 = vadd.f32 %v743, %v762
      %764 = vmatmul.f32.gmra.mxu0 %v724
      %v765 = vpop.f32.mrf.mxu0
      %v766 = vadd.f32 %v743, %v765
      %767 = vdwg.mxu0
      %v768 = vadd.f32 %v763, %v417
      %v769 = vadd.f32 %v766, %v418
      %770 = vst [vmem:[%s415] sm:$0xff] %v768
      %771 = vst [vmem:[%s415 + $0x8] sm:$0xff] %v769
      %s772 = smul.u32 2, %s23
      %p773 = scmp.lt.s32.totalorder %s772, 3
      %s774 = scalar_select %p773, %s772, 3
      %s775 = smul.addr %s774, 8
      %s776 = scalar_lea.vmem %s12, %s775
      // Predicated region
      $region69: #{depthwise_separable_conv.1} parent=67 // pred_check
        %p777 = pneg %p298
      $region70: #{depthwise_separable_conv.1} parent=67 // pred_check_branch
        %779 = sbr.rel (%p777) target = $region72
      $region71: #{depthwise_separable_conv.1} parent=67 // pred_region
        %s780 = smul.u32 2, %s23
      $region72: #{depthwise_separable_conv.1} parent=67 // pred_fallthru
        _
    $region68: #{depthwise_separable_conv.1} parent=5 // pred_fallthru
      _
    %p781 = scmp.le.s32.totalorder 2, %s18
    // Predicated region
    $region73: #{depthwise_separable_conv.1} parent=5 // pred_check
      %p782 = pneg %p781
    $region74: #{depthwise_separable_conv.1} parent=5 // pred_check_branch
      %784 = sbr.rel (%p782) target = $region76
    $region75: #{depthwise_separable_conv.1} parent=5 // pred_region
      %s785 = ssub.s32 %s18, 2
      // Predicated region
      $region77: #{depthwise_separable_conv.1} parent=75 // pred_check
        %p786 = pneg %p304
      $region78: #{depthwise_separable_conv.1} parent=75 // pred_check_branch
        %788 = sbr.rel (%p786) target = $region80
      $region79: #{depthwise_separable_conv.1} parent=75 // pred_region
        %s789 = smul.u32 2, %s24
        %p790 = scmp.lt.s32.totalorder %s789, 3
        %s791 = scalar_select %p790, %s789, 3
        %s792 = smul.addr %s791, 8
        %s793 = scalar_lea.vmem %s12, %s792
      $region80: #{depthwise_separable_conv.1} parent=75 // pred_fallthru
        _
    $region76: #{depthwise_separable_conv.1} parent=5 // pred_fallthru
      _
  $region6: #{depthwise_separable_conv.1} parent=0 // loop_footer
    %s22 = sadd.s32 1, %s18
  $region7: #{depthwise_separable_conv.1} parent=0 // loop_footer_branch
    %17 = sbr.rel target = $region3
  $region8: #{depthwise_separable_conv.1} parent=0 // loop_exit
    _

</llo_original>
